<compile_context>
chip_gen: v6e
topology: v6e:2x2x1
jax: 0.10.0
libtpu: 0.0.40
codegen_flags: <defaults>
</compile_context>

<pallas_src>
import math
from functools import partial

import jax
import jax.numpy as jnp
import numpy as np
from jax import lax
from jax.experimental import pallas as pl
from jax.experimental.pallas import tpu as pltpu  # noqa: F401  (TPU backend)


def _adaptive_bounds(in_size, out_size):
    """PyTorch AdaptiveMaxPool2d window boundaries (static Python ints)."""
    starts = [(i * in_size) // out_size for i in range(out_size)]
    ends = [-(-((i + 1) * in_size) // out_size) for i in range(out_size)]  # ceil
    return starts, ends


def _lane_rotate(a, d):
    """Circular left-rotate along the last (lane) axis: out[..., s] = a[..., (s+d) % L]."""
    if d == 0:
        return a
    return jnp.concatenate([a[..., d:], a[..., :d]], axis=-1)


def _build_kernel(N, Cin, Cout, H, W, KH, KW, k_pool):
    HO, WO = H - KH + 1, W - KW + 1
    HW = H * W
    KK = k_pool * k_pool

    hs, he = _adaptive_bounds(HO, k_pool)
    ws, we = _adaptive_bounds(WO, k_pool)
    hh = [e - s for s, e in zip(hs, he)]          # row-window heights
    ww = [e - s for s, e in zip(ws, we)]          # col-window widths
    combos = sorted({(hh[i], ww[j]) for i in range(k_pool) for j in range(k_pool)})
    col_widths = sorted(set(ww))
    row_heights = sorted(set(hh))

    def kernel(x_ref, w_ref, b_ref, sel_ref, o_ref):
        x = x_ref[...]                                            # (N*Cin, H*W)

        # ---- Conv2d as one im2col matmul (batch folded into M) ----------
        taps = [_lane_rotate(x, ki * W + kj)
                for ki in range(KH) for kj in range(KW)]
        patches = jnp.concatenate(taps, axis=0)                   # (KH*KW*N*Cin, H*W)
        y = jnp.dot(w_ref[...], patches,
                    preferred_element_type=jnp.float32)           # (N*Cout, H*W)
        y = jnp.maximum(y + b_ref[...], 0.0)                      # bias + ReLU

        # ---- AdaptiveMaxPool2d: separable running maxima ----------------
        # column pass: R_w[:, p] = max(y[:, p:p+w]) for each distinct width
        col_max = {}
        run, t = y, 1
        for wv in col_widths:
            while t < wv:
                run = jnp.maximum(run, _lane_rotate(y, t))
                t += 1
            col_max[wv] = run
        # row pass: R2_{h,w}[:, p] = max_{u<h} R_w[:, p + u*W]
        pooled = {}
        for wv in col_widths:
            base = col_max[wv]
            run, u = base, 1
            for hv in row_heights:
                while u < hv:
                    run = jnp.maximum(run, _lane_rotate(base, u * W))
                    u += 1
                pooled[(hv, wv)] = run

        # one gather matmul picks the k*k window-anchor lanes
        if len(combos) > 1:
            mm = jnp.concatenate([pooled[c] for c in combos], axis=1)
        else:
            mm = pooled[combos[0]]
        o_ref[...] = jnp.dot(mm, sel_ref[...],
                             preferred_element_type=jnp.float32)  # (N*Cout, k*k)

    # constant 0/1 gather matrix (host side): for each output window (ih, jw)
    # select lane hs*W+ws of the matching running-max slab.
    sel_np = np.zeros((len(combos), HW, KK), np.float32)
    for i in range(k_pool):
        for j in range(k_pool):
            c = combos.index((hh[i], ww[j]))
            sel_np[c, hs[i] * W + ws[j], i * k_pool + j] = 1.0
    sel = jnp.asarray(sel_np.reshape(len(combos) * HW, KK))
    return kernel, sel


@partial(jax.jit, static_argnums=3)
def conv_item_forward(x_nchw, w_oihw, bias, k_pool):
    """Pallas implementation of ConvItem.forward.

    x_nchw : (N, Cin, H, W) float32
    w_oihw : (Cout, Cin, KH, KW) float32
    bias   : (Cout,) float32
    k_pool : int (static), AdaptiveMaxPool2d output size
    returns: (N, Cout, k_pool, k_pool) float32
    """
    N, Cin, H, W = x_nchw.shape
    Cout, Cin2, KH, KW = w_oihw.shape
    assert Cin2 == Cin
    HO, WO = H - KH + 1, W - KW + 1
    assert HO >= 1 and WO >= 1
    HW = H * W
    KK = k_pool * k_pool

    kernel, sel = _build_kernel(N, Cin, Cout, H, W, KH, KW, k_pool)

    # free reshape: NCHW -> (N*Cin, H*W); no transpose of the activations.
    x2d = x_nchw.reshape(N * Cin, HW).astype(jnp.float32)

    # Expand the conv weight to the block-diagonal im2col weight
    # (N*Cout, KH*KW*N*Cin) so the batch folds into the MXU M dimension.
    # Tiny host-side prep (288 weights), done once per compile.
    wk = jnp.transpose(w_oihw.astype(jnp.float32), (2, 3, 1, 0))  # (KH,KW,Cin,Cout)
    wk = wk.reshape(KH * KW, Cin, Cout)                           # [k, c, o]
    w_big = jnp.einsum("nm,kco->nokmc", jnp.eye(N, dtype=jnp.float32), wk)
    w_big = w_big.reshape(N * Cout, KH * KW * N * Cin)
    b_big = jnp.tile(bias.astype(jnp.float32), N).reshape(N * Cout, 1)

    out2d = pl.pallas_call(
        kernel,
        out_shape=jax.ShapeDtypeStruct((N * Cout, KK), jnp.float32),
    )(x2d, w_big, b_big, sel)

    # free reshape back to the PyTorch (N, Cout, k, k) convention
    return out2d.reshape(N, Cout, k_pool, k_pool)


def conv_item_reference(x_nchw, w_oihw, bias, k_pool):
    """Pure-JAX reference (matches PyTorch semantics)."""
    y = lax.conv_general_dilated(
        x_nchw, w_oihw, window_strides=(1, 1), padding="VALID",
        dimension_numbers=("NCHW", "OIHW", "NCHW"),
    )
    y = y + bias.reshape(1, -1, 1, 1)
    y = jnp.maximum(y, 0.0)
    _, _, HO, WO = y.shape
    hs, he = _adaptive_bounds(HO, k_pool)
    ws, we = _adaptive_bounds(WO, k_pool)
    rows = []
    for i in range(k_pool):
        cols = []
        for j in range(k_pool):
            cols.append(jnp.max(y[:, :, hs[i]:he[i], ws[j]:we[j]], axis=(2, 3)))
        rows.append(jnp.stack(cols, axis=-1))
    return jnp.stack(rows, axis=-2)  # (N, Cout, k_pool, k_pool)


if __name__ == "__main__":
    # Module hyper-parameters (small, consistent with ConvItem.__init__)
    N, Cin, H, W = 2, 4, 16, 16
    Cout, K, K_POOL = 8, 3, 4

    key = jax.random.PRNGKey(0)
    kx, kw, kb = jax.random.split(key, 3)

    x = jax.random.normal(kx, (N, Cin, H, W), dtype=jnp.float32)

    # Deterministic Conv2d-style init (uniform in +/- 1/sqrt(fan_in))
    fan_in = Cin * K * K
    bound = 1.0 / math.sqrt(fan_in)
    w = jax.random.uniform(kw, (Cout, Cin, K, K), jnp.float32, -bound, bound)
    b = jax.random.uniform(kb, (Cout,), jnp.float32, -bound, bound)

    out = conv_item_forward(x, w, b, K_POOL)
    out = jax.block_until_ready(out)
    assert out.shape == (N, Cout, K_POOL, K_POOL), out.shape

    ref = conv_item_reference(x, w, b, K_POOL)
    if not jnp.allclose(out, ref, atol=1e-4, rtol=1e-4):
        raise AssertionError("Pallas ConvItem output mismatch vs JAX reference")

    print("KERNEL_OK")
</pallas_src>

<mosaic_0001>
module attributes {stable_mosaic.version = 11 : i64} {
  func.func @kernel(%arg0: memref<8x256xf32, #tpu.memory_space<vmem>>, %arg1: memref<16x72xf32, #tpu.memory_space<vmem>>, %arg2: memref<16x1xf32, #tpu.memory_space<vmem>>, %arg3: memref<256x16xf32, #tpu.memory_space<vmem>>, %arg4: memref<16x16xf32, #tpu.memory_space<vmem>>) attributes {dimension_semantics = [], scalar_prefetch = 0 : i64, scratch_operands = 0 : i64, tpu.core_type = #tpu.core_type<tc>} {
    %c0 = arith.constant 0 : index
    %c0_0 = arith.constant 0 : index
    %0 = vector.load %arg0[%c0, %c0_0] : memref<8x256xf32, #tpu.memory_space<vmem>>, vector<8x256xf32>
    %1 = vector.extract_strided_slice %0 {offsets = [0, 1], sizes = [8, 255], strides = [1, 1]} : vector<8x256xf32> to vector<8x255xf32>
    %2 = vector.extract_strided_slice %0 {offsets = [0, 0], sizes = [8, 1], strides = [1, 1]} : vector<8x256xf32> to vector<8x1xf32>
    %3 = tpu.concatenate %1, %2 in 1 : vector<8x255xf32>, vector<8x1xf32> -> vector<8x256xf32>
    %4 = vector.extract_strided_slice %0 {offsets = [0, 2], sizes = [8, 254], strides = [1, 1]} : vector<8x256xf32> to vector<8x254xf32>
    %5 = vector.extract_strided_slice %0 {offsets = [0, 0], sizes = [8, 2], strides = [1, 1]} : vector<8x256xf32> to vector<8x2xf32>
    %6 = tpu.concatenate %4, %5 in 1 : vector<8x254xf32>, vector<8x2xf32> -> vector<8x256xf32>
    %7 = vector.extract_strided_slice %0 {offsets = [0, 16], sizes = [8, 240], strides = [1, 1]} : vector<8x256xf32> to vector<8x240xf32>
    %8 = vector.extract_strided_slice %0 {offsets = [0, 0], sizes = [8, 16], strides = [1, 1]} : vector<8x256xf32> to vector<8x16xf32>
    %9 = tpu.concatenate %7, %8 in 1 : vector<8x240xf32>, vector<8x16xf32> -> vector<8x256xf32>
    %10 = vector.extract_strided_slice %0 {offsets = [0, 17], sizes = [8, 239], strides = [1, 1]} : vector<8x256xf32> to vector<8x239xf32>
    %11 = vector.extract_strided_slice %0 {offsets = [0, 0], sizes = [8, 17], strides = [1, 1]} : vector<8x256xf32> to vector<8x17xf32>
    %12 = tpu.concatenate %10, %11 in 1 : vector<8x239xf32>, vector<8x17xf32> -> vector<8x256xf32>
    %13 = vector.extract_strided_slice %0 {offsets = [0, 18], sizes = [8, 238], strides = [1, 1]} : vector<8x256xf32> to vector<8x238xf32>
    %14 = vector.extract_strided_slice %0 {offsets = [0, 0], sizes = [8, 18], strides = [1, 1]} : vector<8x256xf32> to vector<8x18xf32>
    %15 = tpu.concatenate %13, %14 in 1 : vector<8x238xf32>, vector<8x18xf32> -> vector<8x256xf32>
    %16 = vector.extract_strided_slice %0 {offsets = [0, 32], sizes = [8, 224], strides = [1, 1]} : vector<8x256xf32> to vector<8x224xf32>
    %17 = vector.extract_strided_slice %0 {offsets = [0, 0], sizes = [8, 32], strides = [1, 1]} : vector<8x256xf32> to vector<8x32xf32>
    %18 = tpu.concatenate %16, %17 in 1 : vector<8x224xf32>, vector<8x32xf32> -> vector<8x256xf32>
    %19 = vector.extract_strided_slice %0 {offsets = [0, 33], sizes = [8, 223], strides = [1, 1]} : vector<8x256xf32> to vector<8x223xf32>
    %20 = vector.extract_strided_slice %0 {offsets = [0, 0], sizes = [8, 33], strides = [1, 1]} : vector<8x256xf32> to vector<8x33xf32>
    %21 = tpu.concatenate %19, %20 in 1 : vector<8x223xf32>, vector<8x33xf32> -> vector<8x256xf32>
    %22 = vector.extract_strided_slice %0 {offsets = [0, 34], sizes = [8, 222], strides = [1, 1]} : vector<8x256xf32> to vector<8x222xf32>
    %23 = vector.extract_strided_slice %0 {offsets = [0, 0], sizes = [8, 34], strides = [1, 1]} : vector<8x256xf32> to vector<8x34xf32>
    %24 = tpu.concatenate %22, %23 in 1 : vector<8x222xf32>, vector<8x34xf32> -> vector<8x256xf32>
    %25 = tpu.concatenate %0, %3, %6, %9, %12, %15, %18, %21, %24 in 0 : vector<8x256xf32>, vector<8x256xf32>, vector<8x256xf32>, vector<8x256xf32>, vector<8x256xf32>, vector<8x256xf32>, vector<8x256xf32>, vector<8x256xf32>, vector<8x256xf32> -> vector<72x256xf32>
    %c0_1 = arith.constant 0 : index
    %c0_2 = arith.constant 0 : index
    %26 = vector.load %arg1[%c0_1, %c0_2] : memref<16x72xf32, #tpu.memory_space<vmem>>, vector<16x72xf32>
    %cst = arith.constant dense<0.000000e+00> : vector<16x256xf32>
    %27 = tpu.matmul %26, %25, %cst {dimension_numbers = #tpu.dot_dimension_numbers<[1], [0], [0], [1], [0, 0, 1, 1], [], []>} : vector<16x72xf32>, vector<72x256xf32>, vector<16x256xf32> -> vector<16x256xf32>
    %c0_3 = arith.constant 0 : index
    %c0_4 = arith.constant 0 : index
    %28 = vector.load %arg2[%c0_3, %c0_4] : memref<16x1xf32, #tpu.memory_space<vmem>>, vector<16x1xf32>
    %29 = vector.broadcast %28 : vector<16x1xf32> to vector<16x256xf32>
    %30 = arith.addf %27, %29 : vector<16x256xf32>
    %cst_5 = arith.constant 0.000000e+00 : f32
    %31 = vector.broadcast %cst_5 : f32 to vector<16x256xf32>
    %32 = arith.maximumf %30, %31 : vector<16x256xf32>
    %33 = vector.extract_strided_slice %32 {offsets = [0, 1], sizes = [16, 255], strides = [1, 1]} : vector<16x256xf32> to vector<16x255xf32>
    %34 = vector.extract_strided_slice %32 {offsets = [0, 0], sizes = [16, 1], strides = [1, 1]} : vector<16x256xf32> to vector<16x1xf32>
    %35 = tpu.concatenate %33, %34 in 1 : vector<16x255xf32>, vector<16x1xf32> -> vector<16x256xf32>
    %36 = arith.maximumf %32, %35 : vector<16x256xf32>
    %37 = vector.extract_strided_slice %32 {offsets = [0, 2], sizes = [16, 254], strides = [1, 1]} : vector<16x256xf32> to vector<16x254xf32>
    %38 = vector.extract_strided_slice %32 {offsets = [0, 0], sizes = [16, 2], strides = [1, 1]} : vector<16x256xf32> to vector<16x2xf32>
    %39 = tpu.concatenate %37, %38 in 1 : vector<16x254xf32>, vector<16x2xf32> -> vector<16x256xf32>
    %40 = arith.maximumf %36, %39 : vector<16x256xf32>
    %41 = vector.extract_strided_slice %32 {offsets = [0, 3], sizes = [16, 253], strides = [1, 1]} : vector<16x256xf32> to vector<16x253xf32>
    %42 = vector.extract_strided_slice %32 {offsets = [0, 0], sizes = [16, 3], strides = [1, 1]} : vector<16x256xf32> to vector<16x3xf32>
    %43 = tpu.concatenate %41, %42 in 1 : vector<16x253xf32>, vector<16x3xf32> -> vector<16x256xf32>
    %44 = arith.maximumf %40, %43 : vector<16x256xf32>
    %45 = vector.extract_strided_slice %44 {offsets = [0, 16], sizes = [16, 240], strides = [1, 1]} : vector<16x256xf32> to vector<16x240xf32>
    %46 = vector.extract_strided_slice %44 {offsets = [0, 0], sizes = [16, 16], strides = [1, 1]} : vector<16x256xf32> to vector<16x16xf32>
    %47 = tpu.concatenate %45, %46 in 1 : vector<16x240xf32>, vector<16x16xf32> -> vector<16x256xf32>
    %48 = arith.maximumf %44, %47 : vector<16x256xf32>
    %49 = vector.extract_strided_slice %44 {offsets = [0, 32], sizes = [16, 224], strides = [1, 1]} : vector<16x256xf32> to vector<16x224xf32>
    %50 = vector.extract_strided_slice %44 {offsets = [0, 0], sizes = [16, 32], strides = [1, 1]} : vector<16x256xf32> to vector<16x32xf32>
    %51 = tpu.concatenate %49, %50 in 1 : vector<16x224xf32>, vector<16x32xf32> -> vector<16x256xf32>
    %52 = arith.maximumf %48, %51 : vector<16x256xf32>
    %53 = vector.extract_strided_slice %44 {offsets = [0, 48], sizes = [16, 208], strides = [1, 1]} : vector<16x256xf32> to vector<16x208xf32>
    %54 = vector.extract_strided_slice %44 {offsets = [0, 0], sizes = [16, 48], strides = [1, 1]} : vector<16x256xf32> to vector<16x48xf32>
    %55 = tpu.concatenate %53, %54 in 1 : vector<16x208xf32>, vector<16x48xf32> -> vector<16x256xf32>
    %56 = arith.maximumf %52, %55 : vector<16x256xf32>
    %c0_6 = arith.constant 0 : index
    %c0_7 = arith.constant 0 : index
    %57 = vector.load %arg3[%c0_6, %c0_7] : memref<256x16xf32, #tpu.memory_space<vmem>>, vector<256x16xf32>
    %cst_8 = arith.constant dense<0.000000e+00> : vector<16x16xf32>
    %58 = tpu.matmul %56, %57, %cst_8 {dimension_numbers = #tpu.dot_dimension_numbers<[1], [0], [0], [1], [0, 0, 1, 1], [], []>} : vector<16x256xf32>, vector<256x16xf32>, vector<16x16xf32> -> vector<16x16xf32>
    %c0_9 = arith.constant 0 : index
    %c0_10 = arith.constant 0 : index
    %59 = vector.load %arg4[%c0_9, %c0_10] : memref<16x16xf32, #tpu.memory_space<vmem>>, vector<16x16xf32>
    tpu.vector_store %arg4[%c0_9, %c0_10], %58 {strides = array<i32>} : memref<16x16xf32, #tpu.memory_space<vmem>>, vector<16x16xf32>,
    return
  }
}

</mosaic_0001>

<llo_original>
// kernel: tile.0
$region0: #{tile.0}
  %s0 = inlined_call_operand.vmem [shape: f32[2,8], index: 0, kind: input, shape index: {}]
  %s1 = inlined_call_operand.vmem [shape: f32[16,1], index: 1, kind: output, shape index: {}]
  $region1: #{tile.0} parent=0
    #allocation0 [shape = 'u8[4096]{0}', space=vmem, size = 0x1000, scoped, tag = 'scoped mem for input reshape']
    %s3 = sshll.u32 1, 2
    %s4 = ssub.s32 %s3, 1
    %v5 = vld [vmem:[%s0] sm:%s4]
    %6 = vst [vmem:[#allocation0] sm:%s4] %v5
    %v7 = vld [vmem:[#allocation0] sm:$0x3]
    %vm8 = vcmask 7168
    %9 = vst.msk [vmem:[%s1] ss:$8 sm:$0x3] %vm8, %v7
    %v10 = vld [vmem:[#allocation0] sm:$0x3]
    %11 = vrot.lane.b32.xlu0 %v10, 127
    %v12 = vpop.permute.xlu0 %11
    %vm13 = vcmask 7168
    %s14 = scalar_lea.vmem %s1, 1
    %15 = vst.msk [vmem:[%s14] ss:$8 sm:$0x3] %vm13, %v12
    %v16 = vld [vmem:[#allocation0] sm:$0x3]
    %17 = vrot.lane.b32.xlu0 %v16, 126
    %v18 = vpop.permute.xlu0 %17
    %vm19 = vcmask 7168
    %s20 = scalar_lea.vmem %s1, 2
    %21 = vst.msk [vmem:[%s20] ss:$8 sm:$0x3] %vm19, %v18
    %v22 = vld [vmem:[#allocation0] sm:$0x3]
    %23 = vrot.lane.b32.xlu0 %v22, 125
    %v24 = vpop.permute.xlu0 %23
    %vm25 = vcmask 7168
    %s26 = scalar_lea.vmem %s1, 3
    %27 = vst.msk [vmem:[%s26] ss:$8 sm:$0x3] %vm25, %v24
    %v28 = vld [vmem:[#allocation0] sm:$0x3]
    %29 = vrot.lane.b32.xlu0 %v28, 124
    %v30 = vpop.permute.xlu0 %29
    %vm31 = vcmask 7168
    %s32 = scalar_lea.vmem %s1, 4
    %33 = vst.msk [vmem:[%s32] ss:$8 sm:$0x3] %vm31, %v30
    %v34 = vld [vmem:[#allocation0] sm:$0x3]
    %35 = vrot.lane.b32.xlu0 %v34, 123
    %v36 = vpop.permute.xlu0 %35
    %vm37 = vcmask 7168
    %s38 = scalar_lea.vmem %s1, 5
    %39 = vst.msk [vmem:[%s38] ss:$8 sm:$0x3] %vm37, %v36
    %v40 = vld [vmem:[#allocation0] sm:$0x3]
    %41 = vrot.lane.b32.xlu0 %v40, 122
    %v42 = vpop.permute.xlu0 %41
    %vm43 = vcmask 7168
    %s44 = scalar_lea.vmem %s1, 6
    %45 = vst.msk [vmem:[%s44] ss:$8 sm:$0x3] %vm43, %v42
    %v46 = vld [vmem:[#allocation0] sm:$0x3]
    %47 = vrot.lane.b32.xlu0 %v46, 121
    %v48 = vpop.permute.xlu0 %47
    %vm49 = vcmask 7168
    %s50 = scalar_lea.vmem %s1, 7
    %51 = vst.msk [vmem:[%s50] ss:$8 sm:$0x3] %vm49, %v48

// kernel: tile.8
$region0: #{tile.8}
  #allocation0 [shape = 's32[1]{0}', space=sflag, size = 0x4, scoped, tag = 'scoped memory for tile.8']
  %s0 = inlined_call_operand.vmem [shape: f32[8], index: 0, kind: input, shape index: {}]
  %s1 = inlined_call_operand.vmem [shape: f32[2,8], index: 1, kind: output, shape index: {}]
  // Predicated region
  $region2: #{tile.8} parent=0 // pred_check
    _
  $region3: #{tile.8} parent=0 // pred_check_branch
    %3 = sbr.rel (0) target = $region5
  $region4: #{tile.8} parent=0 // pred_region
    _
  $region5: #{tile.8} parent=0 // pred_fallthru
    _
  %v4 = vld [vmem:[%s0] ss:$0 sm:$0xff]
  %5 = vst [vmem:[%s1] sm:$0x3] %v4

// kernel: conv_item_forward.1
$region0: #{conv_item_forward.1}
  #allocation0 [shape = 'u32[]', space=smem, size = 0x4, offset = 0x4, fixed_abs, tag = 'smem constant byte address 0x4 - core index']
  #allocation1 [shape = 'u32[144,128]{1,0:T(1,128)}', space=vmem, size = 0x12000, scoped, tag = 'internal scratch']
  %s0 = inlined_call_operand.vmem [shape: f32[8,256], index: 0, kind: input, shape index: {}]
  %s1 = inlined_call_operand.vmem [shape: f32[16,72], index: 1, kind: input, shape index: {}]
  %s2 = inlined_call_operand.vmem [shape: f32[16,1], index: 2, kind: input, shape index: {}]
  %s3 = inlined_call_operand.vmem [shape: f32[256,16], index: 3, kind: input, shape index: {}]
  %s4 = inlined_call_operand.vmem [shape: f32[16,16], index: 4, kind: output, shape index: {}]
  %s5 = sld [smem:[#allocation0]]
  $region26: #{conv_item_forward.1} parent=0
    _
  %s7 = ssub.s32 1, %s5
  %s8 = scalar_select 0, %s7, %s5
  // Predicated region
  $region2: #{conv_item_forward.1} parent=0 // pred_check
    _
  $region3: #{conv_item_forward.1} parent=0 // pred_check_branch
    %10 = sbr.rel (0) target = $region5
  $region4: #{conv_item_forward.1} parent=0 // pred_region
    _
  $region5: #{conv_item_forward.1} parent=0 // pred_fallthru
    _
  // Predicated region
  $region6: #{conv_item_forward.1} parent=0 // pred_check
    _
  $region7: #{conv_item_forward.1} parent=0 // pred_check_branch
    %12 = sbr.rel (0) target = $region9
  $region8: #{conv_item_forward.1} parent=0 // pred_region
    _
  $region9: #{conv_item_forward.1} parent=0 // pred_fallthru
    _
  // Predicated region
  $region10: #{conv_item_forward.1} parent=0 // pred_check
    _
  $region11: #{conv_item_forward.1} parent=0 // pred_check_branch
    %14 = sbr.rel (0) target = $region13
  $region12: #{conv_item_forward.1} parent=0 // pred_region
    _
  $region13: #{conv_item_forward.1} parent=0 // pred_fallthru
    _
  // Predicated region
  $region14: #{conv_item_forward.1} parent=0 // pred_check
    _
  $region15: #{conv_item_forward.1} parent=0 // pred_check_branch
    %16 = sbr.rel (0) target = $region17
  $region16: #{conv_item_forward.1} parent=0 // pred_region
    _
  $region17: #{conv_item_forward.1} parent=0 // pred_fallthru
    _
  %v17 = vld [vmem:[%s0] sm:$0xff]
  %v18 = vld [vmem:[%s0 + $0x8] sm:$0xff]
  %21 = vrot.lane.b32.xlu0 %v17, 127
  %v22 = vpop.permute.xlu0 %21
  %23 = vrot.lane.b32.xlu0 %v18, 127
  %v24 = vpop.permute.xlu0 %23
  %vm25 = vcmask 1039360
  %v26 = vsel %vm25, %v22, %v24
  %v30 = vsel %vm25, %v24, %v22
  %31 = vrot.lane.b32.xlu0 %v17, 126
  %v32 = vpop.permute.xlu0 %31
  %33 = vrot.lane.b32.xlu0 %v18, 126
  %v34 = vpop.permute.xlu0 %33
  %vm35 = vcmask 1031168
  %v36 = vsel %vm35, %v32, %v34
  %v40 = vsel %vm35, %v34, %v32
  %41 = vrot.lane.b32.xlu0 %v17, 112
  %v42 = vpop.permute.xlu0 %41
  %43 = vrot.lane.b32.xlu0 %v18, 112
  %v44 = vpop.permute.xlu0 %43
  %vm45 = vcmask 916480
  %v46 = vsel %vm45, %v42, %v44
  %v50 = vsel %vm45, %v44, %v42
  %51 = vrot.lane.b32.xlu0 %v17, 111
  %v52 = vpop.permute.xlu0 %51
  %53 = vrot.lane.b32.xlu0 %v18, 111
  %v54 = vpop.permute.xlu0 %53
  %vm55 = vcmask 908288
  %v56 = vsel %vm55, %v52, %v54
  %v60 = vsel %vm55, %v54, %v52
  %61 = vrot.lane.b32.xlu0 %v17, 110
  %v62 = vpop.permute.xlu0 %61
  %63 = vrot.lane.b32.xlu0 %v18, 110
  %v64 = vpop.permute.xlu0 %63
  %vm65 = vcmask 900096
  %v66 = vsel %vm65, %v62, %v64
  %v70 = vsel %vm65, %v64, %v62
  %71 = vrot.lane.b32.xlu0 %v17, 96
  %v72 = vpop.permute.xlu0 %71
  %73 = vrot.lane.b32.xlu0 %v18, 96
  %v74 = vpop.permute.xlu0 %73
  %vm75 = vcmask 785408
  %v76 = vsel %vm75, %v72, %v74
  %v80 = vsel %vm75, %v74, %v72
  %81 = vrot.lane.b32.xlu0 %v17, 95
  %v82 = vpop.permute.xlu0 %81
  %83 = vrot.lane.b32.xlu0 %v18, 95
  %v84 = vpop.permute.xlu0 %83
  %vm85 = vcmask 777216
  %v86 = vsel %vm85, %v82, %v84
  %v90 = vsel %vm85, %v84, %v82
  %91 = vrot.lane.b32.xlu0 %v17, 94
  %v92 = vpop.permute.xlu0 %91
  %93 = vrot.lane.b32.xlu0 %v18, 94
  %v94 = vpop.permute.xlu0 %93
  %vm95 = vcmask 769024
  %v96 = vsel %vm95, %v92, %v94
  %v100 = vsel %vm95, %v94, %v92
  %v101 = vld [vmem:[%s1] sm:$0xff]
  %v102 = vld [vmem:[%s1 + $0x8] sm:$0xff]
  %v103 = vld [vmem:[%s2] sm:$0xff]
  %v104 = vld [vmem:[%s2 + $0x8] sm:$0xff]
  %106 = vset.pattern.permute.xlu0 0
  %107 = vperm.xlu0 %106, %v103
  %v108 = vpop.permute.xlu0 %107
  %111 = vset.pattern.permute.xlu0 0
  %112 = vperm.xlu0 %111, %v104
  %v113 = vpop.permute.xlu0 %112
  %vm115 = vcmask 588800
  %v117 = vsel %vm115, %v101, 0
  %v120 = vsel %vm115, %v102, 0
  %122 = vmatprep.subr.mxu0 0.0
  %123 = vmatpush1.msra.mxu0 0.0
  %124 = vmatprep.subr.mxu0 0.0
  %125 = vmatpush1.msra.mxu0 0.0
  %126 = vmatprep.subr.mxu0 0.0
  %127 = vmatpush1.msra.mxu0 0.0
  %128 = vmatprep.subr.mxu0 0.0
  %129 = vmatpush1.msra.mxu0 0.0
  %130 = vmatprep.subr.mxu0 0.0
  %131 = vmatpush1.msra.mxu0 0.0
  %132 = vmatprep.subr.mxu0 0.0
  %133 = vmatpush1.msra.mxu0 0.0
  %134 = vmatprep.subr.mxu0 0.0
  %135 = vmatpush1.msra.mxu0 0.0
  %136 = vmatprep.subr.mxu0 %v100
  %137 = vmatpush1.msra.mxu0 %v96
  %138 = vmatprep.subr.mxu0 %v90
  %139 = vmatpush1.msra.mxu0 %v86
  %140 = vmatprep.subr.mxu0 %v80
  %141 = vmatpush1.msra.mxu0 %v76
  %142 = vmatprep.subr.mxu0 %v70
  %143 = vmatpush1.msra.mxu0 %v66
  %144 = vmatprep.subr.mxu0 %v60
  %145 = vmatpush1.msra.mxu0 %v56
  %146 = vmatprep.subr.mxu0 %v50
  %147 = vmatpush1.msra.mxu0 %v46
  %148 = vmatprep.subr.mxu0 %v40
  %149 = vmatpush1.msra.mxu0 %v36
  %150 = vmatprep.subr.mxu0 %v30
  %151 = vmatpush1.msra.mxu0 %v26
  %152 = vmatprep.subr.mxu0 %v18
  %153 = vmatpush1.msra.mxu0 %v17
  %154 = vmatprep.subr.mxu0 0.0
  %155 = vmatpush2.msra.mxu0 0.0
  %156 = vmatprep.subr.mxu0 0.0
  %157 = vmatpush2.msra.mxu0 0.0
  %158 = vmatprep.subr.mxu0 0.0
  %159 = vmatpush2.msra.mxu0 0.0
  %160 = vmatprep.subr.mxu0 0.0
  %161 = vmatpush2.msra.mxu0 0.0
  %162 = vmatprep.subr.mxu0 0.0
  %163 = vmatpush2.msra.mxu0 0.0
  %164 = vmatprep.subr.mxu0 0.0
  %165 = vmatpush2.msra.mxu0 0.0
  %166 = vmatprep.subr.mxu0 0.0
  %167 = vmatpush2.msra.mxu0 0.0
  %168 = vmatprep.subr.mxu0 0.0
  %169 = vmatpush2.msra.mxu0 0.0
  %170 = vmatprep.subr.mxu0 0.0
  %171 = vmatpush2.msra.mxu0 0.0
  %172 = vmatprep.subr.mxu0 0.0
  %173 = vmatpush2.msra.mxu0 0.0
  %174 = vmatprep.subr.mxu0 0.0
  %175 = vmatpush2.msra.mxu0 0.0
  %176 = vmatprep.subr.mxu0 0.0
  %177 = vmatpush2.msra.mxu0 0.0
  %178 = vmatprep.subr.mxu0 0.0
  %179 = vmatpush2.msra.mxu0 0.0
  %180 = vmatprep.subr.mxu0 0.0
  %181 = vmatpush2.msra.mxu0 0.0
  %182 = vmatprep.subr.mxu0 0.0
  %183 = vmatpush2.msra.mxu0 0.0
  %184 = vmatprep.subr.mxu0 0.0
  %185 = vmatpush2.msra.mxu0 0.0
  %186 = vmatprep.mubr.f32.mxu0 0.0
  %187 = vmatmul.mubr.f32.gmra.mxu0 %v117
  %v188 = vpop.f32.mrf.mxu0
  %v189 = vadd.f32 %v108, %v188
  %v190 = vpop.f32.mrf.mxu0
  %v191 = vadd.f32 %v108, %v190
  %192 = vmatprep.mubr.f32.mxu0 0.0
  %193 = vmatmul.mubr.f32.gmra.mxu0 %v120
  %v194 = vpop.f32.mrf.mxu0
  %v195 = vadd.f32 %v113, %v194
  %v196 = vpop.f32.mrf.mxu0
  %v197 = vadd.f32 %v113, %v196
  %198 = vdwg.mxu0
  %v199 = vmax.f32 %v189, 0.0
  %v200 = vmax.f32 %v191, 0.0
  %v201 = vmax.f32 %v195, 0.0
  %v202 = vmax.f32 %v197, 0.0
  %207 = vrot.lane.b32.xlu0 %v199, 127
  %v208 = vpop.permute.xlu0 %207
  %209 = vrot.lane.b32.xlu0 %v200, 127
  %v210 = vpop.permute.xlu0 %209
  %211 = vrot.lane.b32.xlu0 %v201, 127
  %v212 = vpop.permute.xlu0 %211
  %213 = vrot.lane.b32.xlu0 %v202, 127
  %v214 = vpop.permute.xlu0 %213
  %v215 = vsel %vm25, %v208, %v210
  %v216 = vsel %vm25, %v212, %v214
  %v223 = vsel %vm25, %v210, %v208
  %v224 = vsel %vm25, %v214, %v212
  %v225 = vmax.f32 %v199, %v215
  %v226 = vmax.f32 %v200, %v223
  %v227 = vmax.f32 %v201, %v216
  %v228 = vmax.f32 %v202, %v224
  %229 = vrot.lane.b32.xlu0 %v199, 126
  %v230 = vpop.permute.xlu0 %229
  %231 = vrot.lane.b32.xlu0 %v200, 126
  %v232 = vpop.permute.xlu0 %231
  %233 = vrot.lane.b32.xlu0 %v201, 126
  %v234 = vpop.permute.xlu0 %233
  %235 = vrot.lane.b32.xlu0 %v202, 126
  %v236 = vpop.permute.xlu0 %235
  %v237 = vsel %vm35, %v230, %v232
  %v238 = vsel %vm35, %v234, %v236
  %v245 = vsel %vm35, %v232, %v230
  %v246 = vsel %vm35, %v236, %v234
  %v247 = vmax.f32 %v225, %v237
  %v248 = vmax.f32 %v226, %v245
  %v249 = vmax.f32 %v227, %v238
  %v250 = vmax.f32 %v228, %v246
  %251 = vrot.lane.b32.xlu0 %v199, 125
  %v252 = vpop.permute.xlu0 %251
  %253 = vrot.lane.b32.xlu0 %v200, 125
  %v254 = vpop.permute.xlu0 %253
  %255 = vrot.lane.b32.xlu0 %v201, 125
  %v256 = vpop.permute.xlu0 %255
  %257 = vrot.lane.b32.xlu0 %v202, 125
  %v258 = vpop.permute.xlu0 %257
  %vm259 = vcmask 1022976
  %v260 = vsel %vm259, %v252, %v254
  %v261 = vsel %vm259, %v256, %v258
  %v268 = vsel %vm259, %v254, %v252
  %v269 = vsel %vm259, %v258, %v256
  %v270 = vmax.f32 %v247, %v260
  %v271 = vmax.f32 %v248, %v268
  %v272 = vmax.f32 %v249, %v261
  %v273 = vmax.f32 %v250, %v269
  %278 = vrot.lane.b32.xlu0 %v270, 112
  %v279 = vpop.permute.xlu0 %278
  %280 = vrot.lane.b32.xlu0 %v271, 112
  %v281 = vpop.permute.xlu0 %280
  %282 = vrot.lane.b32.xlu0 %v272, 112
  %v283 = vpop.permute.xlu0 %282
  %284 = vrot.lane.b32.xlu0 %v273, 112
  %v285 = vpop.permute.xlu0 %284
  %v286 = vsel %vm45, %v279, %v281
  %v287 = vsel %vm45, %v283, %v285
  %v294 = vsel %vm45, %v281, %v279
  %v295 = vsel %vm45, %v285, %v283
  %v296 = vmax.f32 %v270, %v286
  %v297 = vmax.f32 %v271, %v294
  %v298 = vmax.f32 %v272, %v287
  %v299 = vmax.f32 %v273, %v295
  %300 = vrot.lane.b32.xlu0 %v270, 96
  %v301 = vpop.permute.xlu0 %300
  %302 = vrot.lane.b32.xlu0 %v271, 96
  %v303 = vpop.permute.xlu0 %302
  %304 = vrot.lane.b32.xlu0 %v272, 96
  %v305 = vpop.permute.xlu0 %304
  %306 = vrot.lane.b32.xlu0 %v273, 96
  %v307 = vpop.permute.xlu0 %306
  %v308 = vsel %vm75, %v301, %v303
  %v309 = vsel %vm75, %v305, %v307
  %v316 = vsel %vm75, %v303, %v301
  %v317 = vsel %vm75, %v307, %v305
  %v318 = vmax.f32 %v296, %v308
  %v319 = vmax.f32 %v297, %v316
  %v320 = vmax.f32 %v298, %v309
  %v321 = vmax.f32 %v299, %v317
  %322 = vrot.lane.b32.xlu0 %v270, 80
  %v323 = vpop.permute.xlu0 %322
  %324 = vrot.lane.b32.xlu0 %v271, 80
  %v325 = vpop.permute.xlu0 %324
  %326 = vrot.lane.b32.xlu0 %v272, 80
  %v327 = vpop.permute.xlu0 %326
  %328 = vrot.lane.b32.xlu0 %v273, 80
  %v329 = vpop.permute.xlu0 %328
  %vm330 = vcmask 654336
  %v331 = vsel %vm330, %v323, %v325
  %v332 = vsel %vm330, %v327, %v329
  %v339 = vsel %vm330, %v325, %v323
  %v340 = vsel %vm330, %v329, %v327
  %v341 = vmax.f32 %v318, %v331
  %v342 = vmax.f32 %v319, %v339
  %v343 = vmax.f32 %v320, %v332
  %v344 = vmax.f32 %v321, %v340
  %v345 = vld [vmem:[%s3] sm:$0xff]
  %v346 = vld [vmem:[%s3 + $0x8] sm:$0xff]
  %v347 = vld [vmem:[%s3 + $0x10] sm:$0xff]
  %v348 = vld [vmem:[%s3 + $0x18] sm:$0xff]
  %v349 = vld [vmem:[%s3 + $0x20] sm:$0xff]
  %v350 = vld [vmem:[%s3 + $0x28] sm:$0xff]
  %v351 = vld [vmem:[%s3 + $0x30] sm:$0xff]
  %v352 = vld [vmem:[%s3 + $0x38] sm:$0xff]
  %v353 = vld [vmem:[%s3 + $0x40] sm:$0xff]
  %v354 = vld [vmem:[%s3 + $0x48] sm:$0xff]
  %v355 = vld [vmem:[%s3 + $0x50] sm:$0xff]
  %v356 = vld [vmem:[%s3 + $0x58] sm:$0xff]
  %v357 = vld [vmem:[%s3 + $0x60] sm:$0xff]
  %v358 = vld [vmem:[%s3 + $0x68] sm:$0xff]
  %v359 = vld [vmem:[%s3 + $0x70] sm:$0xff]
  %v360 = vld [vmem:[%s3 + $0x78] sm:$0xff]
  %v361 = vld [vmem:[%s3 + $0x80] sm:$0xff]
  %v362 = vld [vmem:[%s3 + $0x88] sm:$0xff]
  %v363 = vld [vmem:[%s3 + $0x90] sm:$0xff]
  %v364 = vld [vmem:[%s3 + $0x98] sm:$0xff]
  %v365 = vld [vmem:[%s3 + $0xa0] sm:$0xff]
  %v366 = vld [vmem:[%s3 + $0xa8] sm:$0xff]
  %v367 = vld [vmem:[%s3 + $0xb0] sm:$0xff]
  %v368 = vld [vmem:[%s3 + $0xb8] sm:$0xff]
  %v369 = vld [vmem:[%s3 + $0xc0] sm:$0xff]
  %v370 = vld [vmem:[%s3 + $0xc8] sm:$0xff]
  %v371 = vld [vmem:[%s3 + $0xd0] sm:$0xff]
  %v372 = vld [vmem:[%s3 + $0xd8] sm:$0xff]
  %v373 = vld [vmem:[%s3 + $0xe0] sm:$0xff]
  %v374 = vld [vmem:[%s3 + $0xe8] sm:$0xff]
  %v375 = vld [vmem:[%s3 + $0xf0] sm:$0xff]
  %v376 = vld [vmem:[%s3 + $0xf8] sm:$0xff]
  %377 = vmatprep.subr.mxu0 0.0
  %378 = vmatpush1.msra.mxu0 %v360
  %379 = vmatprep.subr.mxu0 0.0
  %380 = vmatpush1.msra.mxu0 %v359
  %381 = vmatprep.subr.mxu0 0.0
  %382 = vmatpush1.msra.mxu0 %v358
  %383 = vmatprep.subr.mxu0 0.0
  %384 = vmatpush1.msra.mxu0 %v357
  %385 = vmatprep.subr.mxu0 0.0
  %386 = vmatpush1.msra.mxu0 %v356
  %387 = vmatprep.subr.mxu0 0.0
  %388 = vmatpush1.msra.mxu0 %v355
  %389 = vmatprep.subr.mxu0 0.0
  %390 = vmatpush1.msra.mxu0 %v354
  %391 = vmatprep.subr.mxu0 0.0
  %392 = vmatpush1.msra.mxu0 %v353
  %393 = vmatprep.subr.mxu0 0.0
  %394 = vmatpush1.msra.mxu0 %v352
  %395 = vmatprep.subr.mxu0 0.0
  %396 = vmatpush1.msra.mxu0 %v351
  %397 = vmatprep.subr.mxu0 0.0
  %398 = vmatpush1.msra.mxu0 %v350
  %399 = vmatprep.subr.mxu0 0.0
  %400 = vmatpush1.msra.mxu0 %v349
  %401 = vmatprep.subr.mxu0 0.0
  %402 = vmatpush1.msra.mxu0 %v348
  %403 = vmatprep.subr.mxu0 0.0
  %404 = vmatpush1.msra.mxu0 %v347
  %405 = vmatprep.subr.mxu0 0.0
  %406 = vmatpush1.msra.mxu0 %v346
  %407 = vmatprep.subr.mxu0 0.0
  %408 = vmatpush1.msra.mxu0 %v345
  %409 = vmatprep.subr.mxu0 0.0
  %410 = vmatpush2.msra.mxu0 %v376
  %411 = vmatprep.subr.mxu0 0.0
  %412 = vmatpush2.msra.mxu0 %v375
  %413 = vmatprep.subr.mxu0 0.0
  %414 = vmatpush2.msra.mxu0 %v374
  %415 = vmatprep.subr.mxu0 0.0
  %416 = vmatpush2.msra.mxu0 %v373
  %417 = vmatprep.subr.mxu0 0.0
  %418 = vmatpush2.msra.mxu0 %v372
  %419 = vmatprep.subr.mxu0 0.0
  %420 = vmatpush2.msra.mxu0 %v371
  %421 = vmatprep.subr.mxu0 0.0
  %422 = vmatpush2.msra.mxu0 %v370
  %423 = vmatprep.subr.mxu0 0.0
  %424 = vmatpush2.msra.mxu0 %v369
  %425 = vmatprep.subr.mxu0 0.0
  %426 = vmatpush2.msra.mxu0 %v368
  %427 = vmatprep.subr.mxu0 0.0
  %428 = vmatpush2.msra.mxu0 %v367
  %429 = vmatprep.subr.mxu0 0.0
  %430 = vmatpush2.msra.mxu0 %v366
  %431 = vmatprep.subr.mxu0 0.0
  %432 = vmatpush2.msra.mxu0 %v365
  %433 = vmatprep.subr.mxu0 0.0
  %434 = vmatpush2.msra.mxu0 %v364
  %435 = vmatprep.subr.mxu0 0.0
  %436 = vmatpush2.msra.mxu0 %v363
  %437 = vmatprep.subr.mxu0 0.0
  %438 = vmatpush2.msra.mxu0 %v362
  %439 = vmatprep.subr.mxu0 0.0
  %440 = vmatpush2.msra.mxu0 %v361
  %441 = vmatprep.mubr.f32.mxu0 %v342
  %442 = vmatmul.mubr.f32.gmra.mxu0 %v341
  %v443 = vpop.f32.mrf.mxu0
  %v444 = vadd.f32 0.0, %v443
  %v445 = vpop.f32.mrf.mxu0
  %446 = vmatprep.mubr.f32.mxu0 %v344
  %447 = vmatmul.mubr.f32.gmra.mxu0 %v343
  %v448 = vpop.f32.mrf.mxu0
  %v449 = vadd.f32 0.0, %v448
  %v450 = vpop.f32.mrf.mxu0
  %451 = vdwg.mxu0
  %vm452 = vcmask 130048
  %453 = vst.msk [vmem:[%s4] sm:$0xff] %vm452, %v444
  %454 = vst.msk [vmem:[%s4 + $0x8] sm:$0xff] %vm452, %v449
  // Predicated region
  $region18: #{conv_item_forward.1} parent=0 // pred_check
    _
  $region19: #{conv_item_forward.1} parent=0 // pred_check_branch
    %456 = sbr.rel (0) target = $region21
  $region20: #{conv_item_forward.1} parent=0 // pred_region
    _
  $region21: #{conv_item_forward.1} parent=0 // pred_fallthru
    _
  // Predicated region
  $region22: #{conv_item_forward.1} parent=0 // pred_check
    _
  $region23: #{conv_item_forward.1} parent=0 // pred_check_branch
    %458 = sbr.rel (0) target = $region25
  $region24: #{conv_item_forward.1} parent=0 // pred_region
    _
  $region25: #{conv_item_forward.1} parent=0 // pred_fallthru
    _

</llo_original>
